<compile_context>
chip_gen: v7x
topology: tpu7x:2x2x1
jax: 0.10.0
libtpu: 0.0.40
codegen_flags: <defaults>
</compile_context>

<pallas_src>
import jax
import jax.numpy as jnp
from jax.experimental import pallas as pl
from jax.experimental.pallas import tpu as pltpu


def _round_up(x: int, m: int) -> int:
    return ((x + m - 1) // m) * m


def hypgcn_conv_kernel(l_ref, xw1_ref, xw2_ref, b_ref, o_ref, acc_ref):
    """One (row-tile, k-tile) step of Y = relu(L_hgnn @ XW1 + L_comb @ XW2 + b).

    l_ref   : [2, tm, tk] bf16   (0 = L_HGNN tile, 1 = 0.5*(L_sym+L_rw) tile)
    xw1_ref : [tk, Cp]    bf16   (X @ W1^T, zero-padded to Cp lanes)
    xw2_ref : [tk, Cp]    bf16   (X @ W2^T, zero-padded to Cp lanes)
    b_ref   : [1, Cp]     f32    (bias, zero-padded)
    o_ref   : [tm, Cp]    f32
    acc_ref : [tm, Cp]    f32 VMEM scratch (accumulator across the k axis)
    """
    k = pl.program_id(1)

    @pl.when(k == 0)
    def _():
        acc_ref[...] = jnp.zeros_like(acc_ref)

    acc_ref[...] += (
        jnp.dot(l_ref[0], xw1_ref[...], preferred_element_type=jnp.float32)
        + jnp.dot(l_ref[1], xw2_ref[...], preferred_element_type=jnp.float32)
    )

    @pl.when(k == pl.num_programs(1) - 1)
    def _():
        # ReLU; Dropout is identity at inference time.
        # TODO(synk): training-mode dropout (drop_rate) would use pltpu.prng_seed /
        # pltpu.prng_random_bits; omitted since eval-mode forward is identity.
        o_ref[...] = jnp.maximum(acc_ref[...] + b_ref[...], 0.0).astype(o_ref.dtype)


def hypgcn_graph_conv(l_stack, X, W, b, *, tm=256, tk=256):
    """One Hypergcn_GraphConv layer.

    l_stack : [2, N, N] bf16  (stacked [L_HGNN, 0.5*(L_sym+L_rw)])
    X       : [N, C_in] float
    W       : [C_out, 2*C_in] float32 (PyTorch nn.Linear weight layout)
    b       : [C_out] float32
    returns : [N, C_out] float32
    """
    N = l_stack.shape[1]
    C = X.shape[1]
    Cout = W.shape[0]
    assert W.shape[1] == 2 * C
    tm = min(tm, N)
    tk = min(tk, N)
    # TODO(synk): arbitrary N needs zero-padding of L/X to tile multiples; the
    # static-induction graphs used here satisfy N % 128 == 0.
    assert N % tm == 0 and N % tk == 0

    # Fold concat+linear into the small right-hand operands (exact algebra):
    #   concat([L_h@X, L_c@X], 1) @ W^T == L_h @ (X @ W1^T) + L_c @ (X @ W2^T)
    Xf = X.astype(jnp.float32)
    xw1 = Xf @ W[:, :C].astype(jnp.float32).T  # [N, Cout]
    xw2 = Xf @ W[:, C:].astype(jnp.float32).T  # [N, Cout]

    # Pad the lane (output-feature) dim to a multiple of 128 -> unmasked stores.
    Cp = _round_up(Cout, 128)
    pad = Cp - Cout
    xw1 = jnp.pad(xw1, ((0, 0), (0, pad))).astype(jnp.bfloat16)
    xw2 = jnp.pad(xw2, ((0, 0), (0, pad))).astype(jnp.bfloat16)
    b2d = jnp.pad(b.astype(jnp.float32), (0, pad)).reshape(1, Cp)

    grid = (N // tm, N // tk)

    flops = 2 * 2 * N * N * Cp
    bytes_accessed = (
        l_stack.size * 2        # two bf16 Laplacian streams (dominant)
        + 2 * N * Cp * 2        # XW1 / XW2 (bf16)
        + N * Cp * 4            # f32 output
        + Cp * 4                # bias
    )
    cost = pl.CostEstimate(flops=flops, transcendentals=0,
                           bytes_accessed=bytes_accessed)

    out = pl.pallas_call(
        hypgcn_conv_kernel,
        out_shape=jax.ShapeDtypeStruct((N, Cp), jnp.float32),
        grid_spec=pltpu.PrefetchScalarGridSpec(
            num_scalar_prefetch=0,
            grid=grid,
            in_specs=[
                pl.BlockSpec((2, tm, tk), lambda i, k: (0, i, k)),  # stacked L tiles
                pl.BlockSpec((tk, Cp), lambda i, k: (k, 0)),        # X @ W1^T
                pl.BlockSpec((tk, Cp), lambda i, k: (k, 0)),        # X @ W2^T
                pl.BlockSpec((1, Cp), lambda i, k: (0, 0)),         # bias
            ],
            out_specs=pl.BlockSpec((tm, Cp), lambda i, k: (i, 0)),
            scratch_shapes=[pltpu.VMEM((tm, Cp), jnp.float32)],
        ),
        compiler_params=pltpu.CompilerParams(
            dimension_semantics=("parallel", "arbitrary"),
            # Double-buffered tiles: 2*(2*tm*tk*2 + 2*tk*Cp*2 + tm*Cp*4) bytes
            # plus the f32 accumulator; with tm=tk=512, Cp=128 that is ~4.5 MiB,
            # well under a 48 MiB ceiling that is safe on v5e/v6e (128 MiB VMEM)
            # and v7x (64 MiB VMEM).
            vmem_limit_bytes=48 * 1024 * 1024,
        ),
        cost_estimate=cost,
    )(l_stack, xw1, xw2, b2d)

    return out[:, :Cout]


def hypgnet_forward(L_hgnn, L_sym, L_rw, X, params, *, tm=256, tk=256):
    """HypGNet forward: two stacked Hypergcn_GraphConv layers sharing L_*.

    params : list of (W, b) with W in PyTorch nn.Linear layout [Cout, 2*Cin].
    At realistic N keep tm/tk large (default 256+) and N/tm >= 8 so both v7x
    TensorCores get pipelined work.
    """
    # Merge the sym/rw smoothing streams once, stack with L_HGNN, cast to bf16:
    # the kernel then streams 2 (not 3) N^2 matrices at half the bytes each.
    l_comb = 0.5 * (L_sym.astype(jnp.float32) + L_rw.astype(jnp.float32))
    l_stack = jnp.stack([L_hgnn.astype(jnp.float32), l_comb]).astype(jnp.bfloat16)

    H = X
    for (W, b) in params:
        H = hypgcn_graph_conv(l_stack, H, W, b, tm=tm, tk=tk)
    return H


def reference_layer(L_hgnn, L_sym, L_rw, X, W, b):
    x_hgnn = L_hgnn @ X
    x_sym_rw = 0.5 * (L_sym @ X + L_rw @ X)
    x_spec = jnp.concatenate([x_hgnn, x_sym_rw], axis=1)
    return jnp.maximum(x_spec @ W.T + b, 0.0)


def reference_forward(L_hgnn, L_sym, L_rw, X, params):
    H = X
    for (W, b) in params:
        H = reference_layer(L_hgnn, L_sym, L_rw, H, W, b)
    return H


if __name__ == "__main__":
    # Small deterministic problem: 256 nodes, 16 -> 32 -> 32 features.
    N, C_in, C_hid, C_out = 256, 16, 32, 32

    key = jax.random.PRNGKey(0)
    k_lh, k_ls, k_lr, k_x, k_w1, k_b1, k_w2, k_b2 = jax.random.split(key, 8)

    L_hgnn = jax.random.normal(k_lh, (N, N), dtype=jnp.float32) * 0.1
    L_sym = jax.random.normal(k_ls, (N, N), dtype=jnp.float32) * 0.1
    L_rw = jax.random.normal(k_lr, (N, N), dtype=jnp.float32) * 0.1
    X = jax.random.normal(k_x, (N, C_in), dtype=jnp.float32)

    def linear_init(kw, kb, fan_in, fan_out):
        # nn.Linear(fan_in, fan_out) default uniform init, deterministic in-script.
        bound = 1.0 / jnp.sqrt(jnp.float32(fan_in))
        W = jax.random.uniform(kw, (fan_out, fan_in), jnp.float32, -bound, bound)
        b = jax.random.uniform(kb, (fan_out,), jnp.float32, -bound, bound)
        return W, b

    params = [
        linear_init(k_w1, k_b1, 2 * C_in, C_hid),   # Hypergcn_GraphConv(in, hid)
        linear_init(k_w2, k_b2, 2 * C_hid, C_out),  # Hypergcn_GraphConv(hid, out)
    ]

    # tm=tk=128 here only to exercise the 2x2 grid (row tiling + k-accumulation)
    # at toy size; production calls keep the larger defaults.
    out = hypgnet_forward(L_hgnn, L_sym, L_rw, X, params, tm=128, tk=128)
    out = jax.block_until_ready(out)

    ref = reference_forward(L_hgnn, L_sym, L_rw, X, params)
    assert out.shape == (N, C_out)
    max_err = float(jnp.max(jnp.abs(out - ref)))
    # bf16 Laplacian/RHS streams -> loose tolerance vs the f32 reference.
    assert jnp.allclose(out, ref, atol=5e-2, rtol=5e-2), (
        f"mismatch vs reference (max abs err {max_err})")

    print("KERNEL_OK")
</pallas_src>

<mosaic_0001>
module attributes {stable_mosaic.version = 11 : i64} {
  func.func @hypgcn_conv_kernel(%arg0: i32, %arg1: i32, %arg2: memref<2x128x128xbf16, #tpu.memory_space<vmem>>, %arg3: memref<128x128xbf16, #tpu.memory_space<vmem>>, %arg4: memref<128x128xbf16, #tpu.memory_space<vmem>>, %arg5: memref<1x128xf32, #tpu.memory_space<vmem>>, %arg6: memref<128x128xf32, #tpu.memory_space<vmem>>, %arg7: memref<128x128xf32, #tpu.memory_space<vmem>>) attributes {dimension_semantics = [#tpu.dimension_semantics<parallel>, #tpu.dimension_semantics<arbitrary>], iteration_bounds = array<i64: 2, 2>, scalar_prefetch = 0 : i64, scratch_operands = 1 : i64, tpu.core_type = #tpu.core_type<tc>, window_params = [{transform_indices = @transform_0, window_bounds = array<i64: 2, 128, 128>}, {transform_indices = @transform_1, window_bounds = array<i64: 128, 128>}, {transform_indices = @transform_2, window_bounds = array<i64: 128, 128>}, {pipeline_mode = #tpu.pipeline_mode<synchronous>, transform_indices = @transform_3, window_bounds = array<i64: 1, 128>}, {transform_indices = @transform_4, window_bounds = array<i64: 128, 128>}]} {
    %c0_i32 = arith.constant 0 : i32
    %0 = arith.cmpi eq, %arg1, %c0_i32 : i32
    %1 = arith.extui %0 : i1 to i32
    %c0_i32_0 = arith.constant 0 : i32
    %2 = arith.cmpi ne, %1, %c0_i32_0 : i32
    scf.if %2 {
      %cst_15 = arith.constant 0.000000e+00 : f32
      %18 = vector.broadcast %cst_15 : f32 to vector<128x128xf32>
      %c0_16 = arith.constant 0 : index
      %c0_17 = arith.constant 0 : index
      %19 = vector.load %arg7[%c0_16, %c0_17] : memref<128x128xf32, #tpu.memory_space<vmem>>, vector<128x128xf32>
      tpu.vector_store %arg7[%c0_16, %c0_17], %18 {strides = array<i32>} : memref<128x128xf32, #tpu.memory_space<vmem>>, vector<128x128xf32>,
    } else {
    }
    %c0 = arith.constant 0 : index
    %c0_1 = arith.constant 0 : index
    %3 = vector.load %arg7[%c0, %c0_1] : memref<128x128xf32, #tpu.memory_space<vmem>>, vector<128x128xf32>
    %c0_2 = arith.constant 0 : index
    %c0_3 = arith.constant 0 : index
    %c0_4 = arith.constant 0 : index
    %4 = vector.load %arg2[%c0_2, %c0_3, %c0_4] : memref<2x128x128xbf16, #tpu.memory_space<vmem>>, vector<1x128x128xbf16>
    %5 = vector.shape_cast %4 : vector<1x128x128xbf16> to vector<128x128xbf16>
    %c0_5 = arith.constant 0 : index
    %c0_6 = arith.constant 0 : index
    %6 = vector.load %arg3[%c0_5, %c0_6] : memref<128x128xbf16, #tpu.memory_space<vmem>>, vector<128x128xbf16>
    %cst = arith.constant dense<0.000000e+00> : vector<128x128xf32>
    %7 = tpu.matmul %5, %6, %cst {dimension_numbers = #tpu.dot_dimension_numbers<[1], [0], [0], [1], [0, 0, 1, 1], [], []>} : vector<128x128xbf16>, vector<128x128xbf16>, vector<128x128xf32> -> vector<128x128xf32>
    %c1 = arith.constant 1 : index
    %c0_7 = arith.constant 0 : index
    %c0_8 = arith.constant 0 : index
    %8 = vector.load %arg2[%c1, %c0_7, %c0_8] : memref<2x128x128xbf16, #tpu.memory_space<vmem>>, vector<1x128x128xbf16>
    %9 = vector.shape_cast %8 : vector<1x128x128xbf16> to vector<128x128xbf16>
    %c0_9 = arith.constant 0 : index
    %c0_10 = arith.constant 0 : index
    %10 = vector.load %arg4[%c0_9, %c0_10] : memref<128x128xbf16, #tpu.memory_space<vmem>>, vector<128x128xbf16>
    %cst_11 = arith.constant dense<0.000000e+00> : vector<128x128xf32>
    %11 = tpu.matmul %9, %10, %cst_11 {dimension_numbers = #tpu.dot_dimension_numbers<[1], [0], [0], [1], [0, 0, 1, 1], [], []>} : vector<128x128xbf16>, vector<128x128xbf16>, vector<128x128xf32> -> vector<128x128xf32>
    %12 = arith.addf %7, %11 : vector<128x128xf32>
    %13 = arith.addf %3, %12 : vector<128x128xf32>
    %c0_12 = arith.constant 0 : index
    %c0_13 = arith.constant 0 : index
    %14 = vector.load %arg7[%c0_12, %c0_13] : memref<128x128xf32, #tpu.memory_space<vmem>>, vector<128x128xf32>
    tpu.vector_store %arg7[%c0_12, %c0_13], %13 {strides = array<i32>} : memref<128x128xf32, #tpu.memory_space<vmem>>, vector<128x128xf32>,
    %c1_i32 = arith.constant 1 : i32
    %15 = arith.cmpi eq, %arg1, %c1_i32 : i32
    %16 = arith.extui %15 : i1 to i32
    %c0_i32_14 = arith.constant 0 : i32
    %17 = arith.cmpi ne, %16, %c0_i32_14 : i32
    scf.if %17 {
      %c0_15 = arith.constant 0 : index
      %c0_16 = arith.constant 0 : index
      %18 = vector.load %arg7[%c0_15, %c0_16] : memref<128x128xf32, #tpu.memory_space<vmem>>, vector<128x128xf32>
      %c0_17 = arith.constant 0 : index
      %c0_18 = arith.constant 0 : index
      %19 = vector.load %arg5[%c0_17, %c0_18] : memref<1x128xf32, #tpu.memory_space<vmem>>, vector<1x128xf32>
      %20 = vector.broadcast %19 : vector<1x128xf32> to vector<128x128xf32>
      %21 = arith.addf %18, %20 : vector<128x128xf32>
      %cst_19 = arith.constant 0.000000e+00 : f32
      %22 = vector.broadcast %cst_19 : f32 to vector<128x128xf32>
      %23 = arith.maximumf %21, %22 : vector<128x128xf32>
      %c0_20 = arith.constant 0 : index
      %c0_21 = arith.constant 0 : index
      %24 = vector.load %arg6[%c0_20, %c0_21] : memref<128x128xf32, #tpu.memory_space<vmem>>, vector<128x128xf32>
      tpu.vector_store %arg6[%c0_20, %c0_21], %23 {strides = array<i32>} : memref<128x128xf32, #tpu.memory_space<vmem>>, vector<128x128xf32>,
    } else {
    }
    return
  }
  func.func @transform_0(%arg0: i32, %arg1: i32) -> (i32, i32, i32) {
    %c0_i32 = arith.constant 0 : i32
    %c0_i32_0 = arith.constant 0 : i32
    return %c0_i32, %arg0, %arg1 : i32, i32, i32
  }
  func.func @transform_1(%arg0: i32, %arg1: i32) -> (i32, i32) {
    %c0_i32 = arith.constant 0 : i32
    %c0_i32_0 = arith.constant 0 : i32
    return %arg1, %c0_i32 : i32, i32
  }
  func.func @transform_2(%arg0: i32, %arg1: i32) -> (i32, i32) {
    %c0_i32 = arith.constant 0 : i32
    %c0_i32_0 = arith.constant 0 : i32
    return %arg1, %c0_i32 : i32, i32
  }
  func.func @transform_3(%arg0: i32, %arg1: i32) -> (i32, i32) {
    %c0_i32 = arith.constant 0 : i32
    %c0_i32_0 = arith.constant 0 : i32
    %c0_i32_1 = arith.constant 0 : i32
    return %c0_i32, %c0_i32_0 : i32, i32
  }
  func.func @transform_4(%arg0: i32, %arg1: i32) -> (i32, i32) {
    %c0_i32 = arith.constant 0 : i32
    %c0_i32_0 = arith.constant 0 : i32
    return %arg0, %c0_i32 : i32, i32
  }
}

</mosaic_0001>

<llo_original>
// kernel: tpu_custom_call.1
$region0: #{tpu_custom_call.1}
  #allocation0 [shape = 'u32[]', space=smem, size = 0x4, offset = 0x4, fixed_abs, tag = 'smem constant byte address 0x4 - core index']
  #allocation1 [shape = 'u32[144,128]{1,0:T(1,128)}', space=vmem, size = 0x12000, scoped, tag = 'internal scratch']
  #allocation2 [shape = 'f32[128,128]{1,0:T(8,128)}', space=vmem, size = 0x10000, scoped, tag = 'scratch operand']
  #allocation10 [shape = 's32[]', space=sflag, size = 0x4, offset = 0, fixed_abs, tag = 'sflag constant byte address 0x0 - dummy sync flag']
  %s0 = inlined_call_operand.hbm [shape: bf16[2,256,256], index: 0, kind: input, shape index: {}]
  %s1 = inlined_call_operand.hbm [shape: bf16[256,128], index: 1, kind: input, shape index: {}]
  %s2 = inlined_call_operand.hbm [shape: bf16[256,128], index: 2, kind: input, shape index: {}]
  %s3 = inlined_call_operand.vmem [shape: f32[1,128], index: 3, kind: input, shape index: {}]
  %s4 = inlined_call_operand.hbm [shape: f32[256,128], index: 4, kind: output, shape index: {}]
  %s5 = sld [smem:[#allocation0]]
  $region69: #{tpu_custom_call.1} parent=0
    _
  %s7 = ssub.s32 1, %s5
  %s8 = scalar_select 0, %s7, %s5
  $region1: #{tpu_custom_call.1} parent=0
    #allocation3 [shape = 'u8[131072]{0}', space=vmem, size = 0x20000, scoped, tag = 'input window, operand 0']
    #allocation4 [shape = 's32[2]{0}', space=sflag, size = 0x8, scoped, tag = 'scoped memory for tpu_custom_call.1']
    #allocation5 [shape = 's32[2]{0}', space=sflag, size = 0x8, scoped, tag = 'scoped memory for tpu_custom_call.1']
    #allocation6 [shape = 'u8[65536]{0}', space=vmem, size = 0x10000, scoped, tag = 'input window, operand 1']
    #allocation7 [shape = 's32[2]{0}', space=sflag, size = 0x8, scoped, tag = 'scoped memory for tpu_custom_call.1']
    #allocation8 [shape = 'u8[65536]{0}', space=vmem, size = 0x10000, scoped, tag = 'input window, operand 2']
    #allocation9 [shape = 'u8[131072]{0}', space=vmem, size = 0x20000, scoped, tag = 'output window, operand 0']
    %9 = vsyncpa [#allocation4], 0
    %s10 = scalar_lea.sflag [#allocation4], 1
    %11 = vsyncpa %s10, 0
    %12 = vsyncpa [#allocation7], 0
    %s13 = scalar_lea.sflag [#allocation7], 1
    %14 = vsyncpa %s13, 0
    %15 = vsyncpa [#allocation5], 0
    %s16 = scalar_lea.sflag [#allocation5], 1
    %17 = vsyncpa %s16, 0
    loop: start=0, step=1, limit=6
    $region2: #{tpu_custom_call.1} parent=1 // loop_pre_header
      _
    $region3: #{tpu_custom_call.1} parent=1 // loop_header
      %s19 = sphi 0, %s23
      %p20 = scmp.ge.s32.totalorder %s19, 6
      %s26 = sphi 0, %s38
      %s27 = sphi 0, %s34
      %s28 = sphi 0, %s26
      %s29 = sphi 0, %s27
      %s30 = sphi 0, %s28
      %s31 = sphi 0, %s29
      %s43 = sphi 0, %s45
      %s46 = sphi 0, %s43
      %s47 = sphi 0, %s46
      %s63 = sphi 0, %s47
      %s69 = sphi 0, %s71
      %s72 = sphi 0, %s69
      %s73 = sphi 0, %s72
      %s89 = sphi 0, %s73
      %s95 = sphi 0, %s97
      %s98 = sphi 0, %s95
      %s99 = sphi 0, %s98
      %s115 = sphi 0, %s99
      %s119 = sphi 0, %s119
      %s121 = sphi 0, %s119
      %s122 = sphi 0, %s121
      %s136 = sphi 0, %s122
      %s142 = sphi 0, %s144
      %s145 = sphi 0, %s142
      %s146 = sphi 0, %s145
      %s162 = sphi 0, %s146
    $region4: #{tpu_custom_call.1} parent=1 // loop_header_branch
      %22 = sbr.rel (%p20) target = $region8
    $region5: #{tpu_custom_call.1} parent=1 // loop_body
      %s24 = ssub.s32 %s19, 1
      %s25 = ssub.s32 %s19, 2
      %s32 = sadd.s32 1, %s27
      %p33 = scmp.ge.s32.totalorder %s32, 2
      %s34 = scalar_select %p33, 0, %s32
      %s35 = sadd.s32 1, %s26
      %s36 = scalar_select %p33, %s35, %s26
      %p37 = scmp.ge.s32.totalorder %s36, 2
      %s38 = scalar_select %p37, 0, %s36
      %s39 = ssub.s32 %s26, %s38
      %s40 = ssub.s32 %s27, %s34
      %s41 = sor.u32 %s39, %s40
      %p42 = scmp.eq.s32.totalorder %s41, 0
      %s44 = sadd.s32 %s43, 1
      %s45 = scalar_select %p42, %s43, %s44
      %p48 = pneg %p42
      %p49 = scmp.eq.s32.totalorder %s19, 3
      %p50 = por %p48, %p49
      %p51 = scmp.ne.s32.totalorder %s43, %s46
      %p52 = scmp.eq.s32.totalorder %s19, 0
      %p53 = por %p51, %p52
      %p54 = scmp.ne.s32.totalorder %s43, %s46
      %p55 = scmp.eq.s32.totalorder %s24, 3
      %p56 = por %p54, %p55
      %p57 = scmp.ne.s32.totalorder %s46, %s47
      %p58 = scmp.eq.s32.totalorder %s24, 0
      %p59 = por %p57, %p58
      %p60 = scmp.ne.s32.totalorder %s46, %s47
      %p61 = scmp.eq.s32.totalorder %s25, 3
      %p62 = por %p60, %p61
      %p64 = scmp.ne.s32.totalorder %s47, %s63
      %p65 = scmp.eq.s32.totalorder %s25, 0
      %p66 = por %p64, %p65
      %s67 = ssub.s32 %s27, %s34
      %p68 = scmp.eq.s32.totalorder %s67, 0
      %s70 = sadd.s32 %s69, 1
      %s71 = scalar_select %p68, %s69, %s70
      %p74 = pneg %p68
      %p75 = scmp.eq.s32.totalorder %s19, 3
      %p76 = por %p74, %p75
      %p77 = scmp.ne.s32.totalorder %s69, %s72
      %p78 = scmp.eq.s32.totalorder %s19, 0
      %p79 = por %p77, %p78
      %p80 = scmp.ne.s32.totalorder %s69, %s72
      %p81 = scmp.eq.s32.totalorder %s24, 3
      %p82 = por %p80, %p81
      %p83 = scmp.ne.s32.totalorder %s72, %s73
      %p84 = scmp.eq.s32.totalorder %s24, 0
      %p85 = por %p83, %p84
      %p86 = scmp.ne.s32.totalorder %s72, %s73
      %p87 = scmp.eq.s32.totalorder %s25, 3
      %p88 = por %p86, %p87
      %p90 = scmp.ne.s32.totalorder %s73, %s89
      %p91 = scmp.eq.s32.totalorder %s25, 0
      %p92 = por %p90, %p91
      %s93 = ssub.s32 %s27, %s34
      %p94 = scmp.eq.s32.totalorder %s93, 0
      %s96 = sadd.s32 %s95, 1
      %s97 = scalar_select %p94, %s95, %s96
      %p100 = pneg %p94
      %p101 = scmp.eq.s32.totalorder %s19, 3
      %p102 = por %p100, %p101
      %p103 = scmp.ne.s32.totalorder %s95, %s98
      %p104 = scmp.eq.s32.totalorder %s19, 0
      %p105 = por %p103, %p104
      %p106 = scmp.ne.s32.totalorder %s95, %s98
      %p107 = scmp.eq.s32.totalorder %s24, 3
      %p108 = por %p106, %p107
      %p109 = scmp.ne.s32.totalorder %s98, %s99
      %p110 = scmp.eq.s32.totalorder %s24, 0
      %p111 = por %p109, %p110
      %p112 = scmp.ne.s32.totalorder %s98, %s99
      %p113 = scmp.eq.s32.totalorder %s25, 3
      %p114 = por %p112, %p113
      %p116 = scmp.ne.s32.totalorder %s99, %s115
      %p117 = scmp.eq.s32.totalorder %s25, 0
      %p118 = por %p116, %p117
      %s120 = sadd.s32 %s119, 1
      %p123 = scmp.eq.s32.totalorder %s19, 3
      %p124 = scmp.ne.s32.totalorder %s119, %s121
      %p125 = scmp.eq.s32.totalorder %s19, 0
      %p126 = por %p124, %p125
      %p127 = scmp.ne.s32.totalorder %s119, %s121
      %p128 = scmp.eq.s32.totalorder %s24, 3
      %p129 = por %p127, %p128
      %p130 = scmp.ne.s32.totalorder %s121, %s122
      %p131 = scmp.eq.s32.totalorder %s24, 0
      %p132 = por %p130, %p131
      %p133 = scmp.ne.s32.totalorder %s121, %s122
      %p134 = scmp.eq.s32.totalorder %s25, 3
      %p135 = por %p133, %p134
      %p137 = scmp.ne.s32.totalorder %s122, %s136
      %p138 = scmp.eq.s32.totalorder %s25, 0
      %p139 = por %p137, %p138
      %s140 = ssub.s32 %s26, %s38
      %p141 = scmp.eq.s32.totalorder %s140, 0
      %s143 = sadd.s32 %s142, 1
      %s144 = scalar_select %p141, %s142, %s143
      %p147 = pneg %p141
      %p148 = scmp.eq.s32.totalorder %s19, 3
      %p149 = por %p147, %p148
      %p150 = scmp.ne.s32.totalorder %s142, %s145
      %p151 = scmp.eq.s32.totalorder %s19, 0
      %p152 = por %p150, %p151
      %p153 = scmp.ne.s32.totalorder %s142, %s145
      %p154 = scmp.eq.s32.totalorder %s24, 3
      %p155 = por %p153, %p154
      %p156 = scmp.ne.s32.totalorder %s145, %s146
      %p157 = scmp.eq.s32.totalorder %s24, 0
      %p158 = por %p156, %p157
      %p159 = scmp.ne.s32.totalorder %s145, %s146
      %p160 = scmp.eq.s32.totalorder %s25, 3
      %p161 = por %p159, %p160
      %p163 = scmp.ne.s32.totalorder %s146, %s162
      %p164 = scmp.eq.s32.totalorder %s25, 0
      %p165 = por %p163, %p164
      %p166 = scmp.le.s32.totalorder 1, %s19
      %p167 = scmp.lt.s32.totalorder %s19, 5
      %p168 = pnand %p166, %p167
      %p169 = pneg %p168
      // Predicated region
      $region9: #{tpu_custom_call.1} parent=5 // pred_check
        _
      $region10: #{tpu_custom_call.1} parent=5 // pred_check_branch
        %171 = sbr.rel (%p168) target = $region12
      $region11: #{tpu_custom_call.1} parent=5 // pred_region
        %s172 = ssub.s32 %s19, 1
        // Predicated region
        $region13: #{tpu_custom_call.1} parent=11 // pred_check
          %p173 = pneg %p132
        $region14: #{tpu_custom_call.1} parent=11 // pred_check_branch
          %175 = sbr.rel (%p173) target = $region16
        $region15: #{tpu_custom_call.1} parent=11 // pred_region
          _
        $region16: #{tpu_custom_call.1} parent=11 // pred_fallthru
          _
      $region12: #{tpu_custom_call.1} parent=5 // pred_fallthru
        _
      %p176 = scmp.lt.s32.totalorder %s19, 4
      // Predicated region
      $region17: #{tpu_custom_call.1} parent=5 // pred_check
        %p177 = pneg %p176
      $region18: #{tpu_custom_call.1} parent=5 // pred_check_branch
        %179 = sbr.rel (%p177) target = $region20
      $region19: #{tpu_custom_call.1} parent=5 // pred_region
        // Predicated region
        $region21: #{tpu_custom_call.1} parent=19 // pred_check
          %p180 = pneg %p53
        $region22: #{tpu_custom_call.1} parent=19 // pred_check_branch
          %182 = sbr.rel (%p180) target = $region24
        $region23: #{tpu_custom_call.1} parent=19 // pred_region
          #allocation11 [shape = 'u32[6]{0}', space=smem, size = 0x18, scoped, tag = 'DMA stride descriptor']
          %s183 = sand.u32 %s43, 1
          %s184 = scalar_lea.sflag [#allocation4], %s183
          %s185 = sand.u32 %s43, 1
          %s186 = smul.addr %s185, 128
          %s187 = scalar_lea.vmem [#allocation3], %s186
          %s188 = smul.u32 16, %s26
          %s190 = ssub.s32 2048, 2048
          %191 = vsyncadd %s184, %s190
          %s192 = smul.addr %s188, 2
          %s193 = sadd.s32 %s27, %s192
          %s194 = smul.addr %s193, 64
          %s195 = scalar_lea.hbm %s0, %s194
          %s197 = sshll.u32 1, 14
          %s198 = sxor.u32 4294967295, %s197
          %s200 = sld [smem:[#allocation0]]
          %s201 = sadd.s32 2, %s200
          %s203 = sshll.u32 7, 26
          %s204 = sxor.u32 4294967295, %s203
          %s205 = sand.u32 0, %s204
          %s206 = sshll.u32 %s201, 26
          %s207 = sor.u32 %s205, %s206
          %s208 = sshll.u32 %s187, 4
          %s209 = int_to_ptr.vmem [resolvable:$true] %s208
          %215 = sst [smem:[#allocation11]] 4096
          %s216 = scalar_lea.smem [#allocation11], 1
          %217 = sst [smem:[%s216]] 1024
          %s218 = scalar_lea.smem [#allocation11], 2
          %219 = sst [smem:[%s218]] 16
          %s220 = scalar_lea.smem [#allocation11], 3
          %221 = sst [smem:[%s220]] 128
          %s222 = scalar_lea.smem [#allocation11], 4
          %223 = sst [smem:[%s222]] 64
          %s224 = scalar_lea.smem [#allocation11], 5
          %225 = sst [smem:[%s224]] 4
          %227 = dma.general %s195, 2048, %s209, %s184, [#allocation10], [#allocation11], %s207, 0
        $region24: #{tpu_custom_call.1} parent=19 // pred_fallthru
          _
        // Predicated region
        $region25: #{tpu_custom_call.1} parent=19 // pred_check
          %p228 = pneg %p79
        $region26: #{tpu_custom_call.1} parent=19 // pred_check_branch
          %230 = sbr.rel (%p228) target = $region28
        $region27: #{tpu_custom_call.1} parent=19 // pred_region
          %s231 = sand.u32 %s19, 1
          %s232 = scalar_lea.sflag [#allocation7], %s231
          %s233 = sand.u32 %s69, 1
          %s234 = smul.addr %s233, 64
          %s235 = scalar_lea.vmem [#allocation6], %s234
          %s236 = smul.u32 16, %s27
          %s238 = ssub.s32 1024, 1024
          %239 = vsyncadd %s232, %s238
          %s240 = smul.addr %s236, 64
          %s241 = scalar_lea.hbm %s1, %s240
          %s242 = sshll.u32 %s235, 4
          %s243 = int_to_ptr.vmem [resolvable:$true] %s242
          %248 = dma.hbm_to_vmem [thread:$0]  %s241, 1024, %s243, %s232, 64, 64, 4
        $region28: #{tpu_custom_call.1} parent=19 // pred_fallthru
          _
        // Predicated region
        $region29: #{tpu_custom_call.1} parent=19 // pred_check
          %p249 = pneg %p105
        $region30: #{tpu_custom_call.1} parent=19 // pred_check_branch
          %251 = sbr.rel (%p249) target = $region32
        $region31: #{tpu_custom_call.1} parent=19 // pred_region
          %s252 = sand.u32 %s19, 1
          %s253 = scalar_lea.sflag [#allocation7], %s252
          %s254 = sand.u32 %s95, 1
          %s255 = smul.addr %s254, 64
          %s256 = scalar_lea.vmem [#allocation8], %s255
          %s257 = smul.u32 16, %s27
          %s259 = ssub.s32 1024, 1024
          %260 = vsyncadd %s253, %s259
          %s261 = smul.addr %s257, 64
          %s262 = scalar_lea.hbm %s2, %s261
          %s263 = sshll.u32 %s256, 4
          %s264 = int_to_ptr.vmem [resolvable:$true] %s263
          %269 = dma.hbm_to_vmem [thread:$0]  %s262, 1024, %s264, %s253, 64, 64, 4
        $region32: #{tpu_custom_call.1} parent=19 // pred_fallthru
          _
      $region20: #{tpu_custom_call.1} parent=5 // pred_fallthru
        _
      %p270 = scmp.le.s32.totalorder 1, %s19
      %p271 = scmp.lt.s32.totalorder %s19, 5
      %p272 = pnand %p270, %p271
      %p273 = pneg %p272
      // Predicated region
      $region33: #{tpu_custom_call.1} parent=5 // pred_check
        _
      $region34: #{tpu_custom_call.1} parent=5 // pred_check_branch
        %275 = sbr.rel (%p272) target = $region36
      $region35: #{tpu_custom_call.1} parent=5 // pred_region
        %s276 = ssub.s32 %s19, 1
        %s277 = sand.u32 %s46, 1
        %s278 = scalar_lea.sflag [#allocation4], %s277
        %s279 = sand.u32 %s46, 1
        %s280 = smul.addr %s279, 128
        %s281 = scalar_lea.vmem [#allocation3], %s280
        // Predicated region
        $region37: #{tpu_custom_call.1} parent=35 // pred_check
          %p282 = pneg %p59
        $region38: #{tpu_custom_call.1} parent=35 // pred_check_branch
          %284 = sbr.rel (%p282) target = $region40
        $region39: #{tpu_custom_call.1} parent=35 // pred_region
          %285 = dma.done %s278, 2048
        $region40: #{tpu_custom_call.1} parent=35 // pred_fallthru
          _
        %s286 = sand.u32 %s24, 1
        %s287 = scalar_lea.sflag [#allocation7], %s286
        %s288 = sand.u32 %s72, 1
        %s289 = smul.addr %s288, 64
        %s290 = scalar_lea.vmem [#allocation6], %s289
        // Predicated region
        $region41: #{tpu_custom_call.1} parent=35 // pred_check
          %p291 = pneg %p85
        $region42: #{tpu_custom_call.1} parent=35 // pred_check_branch
          %293 = sbr.rel (%p291) target = $region44
        $region43: #{tpu_custom_call.1} parent=35 // pred_region
          %294 = dma.done %s287, 1024
        $region44: #{tpu_custom_call.1} parent=35 // pred_fallthru
          _
        %s295 = sand.u32 %s24, 1
        %s296 = scalar_lea.sflag [#allocation7], %s295
        %s297 = sand.u32 %s98, 1
        %s298 = smul.addr %s297, 64
        %s299 = scalar_lea.vmem [#allocation8], %s298
        // Predicated region
        $region45: #{tpu_custom_call.1} parent=35 // pred_check
          %p300 = pneg %p111
        $region46: #{tpu_custom_call.1} parent=35 // pred_check_branch
          %302 = sbr.rel (%p300) target = $region48
        $region47: #{tpu_custom_call.1} parent=35 // pred_region
          %303 = dma.done %s296, 1024
        $region48: #{tpu_custom_call.1} parent=35 // pred_fallthru
          _
        %s304 = sand.u32 %s46, 1
        %s305 = scalar_lea.sflag [#allocation4], %s304
        %s306 = sand.u32 %s46, 1
        %s307 = smul.addr %s306, 128
        %s308 = scalar_lea.vmem [#allocation3], %s307
        %p309 = pneg %p59
        %p310 = pneg %p56
        %s311 = sand.u32 %s24, 1
        %s312 = scalar_lea.sflag [#allocation7], %s311
        %s313 = sand.u32 %s72, 1
        %s314 = smul.addr %s313, 64
        %s315 = scalar_lea.vmem [#allocation6], %s314
        %p316 = pneg %p85
        %p317 = pneg %p82
        %s318 = sand.u32 %s24, 1
        %s319 = scalar_lea.sflag [#allocation7], %s318
        %s320 = sand.u32 %s98, 1
        %s321 = smul.addr %s320, 64
        %s322 = scalar_lea.vmem [#allocation8], %s321
        %p323 = pneg %p111
        %p324 = pneg %p108
        %p325 = pneg %p132
        %p326 = pneg %p129
        %p327 = pneg %p158
        %p328 = pneg %p155
        %s329 = sand.u32 %s145, 1
        %s330 = scalar_lea.sflag [#allocation5], %s329
        %s331 = sand.u32 %s145, 1
        %s332 = smul.addr %s331, 128
        %s333 = scalar_lea.vmem [#allocation9], %s332
        %s334 = smul.u32 16, %s28
        %s335 = smul.u32 16, %s29
        %s336 = smul.u32 16, %s29
        %s337 = smul.u32 16, %s28
        %p339 = scmp.eq.s32.totalorder %s29, 0
        // Predicated region
        $region49: #{tpu_custom_call.1} parent=35 // pred_check
          %p340 = pneg %p339
        $region50: #{tpu_custom_call.1} parent=35 // pred_check_branch
          %342 = sbr.rel (%p340) target = $region52
        $region51: #{tpu_custom_call.1} parent=35 // pred_region
          %343 = vst [vmem:[#allocation2] sm:$0xff] 0.0
          %344 = vst [vmem:[#allocation2 + $0x8] sm:$0xff] 0.0
          %345 = vst [vmem:[#allocation2 + $0x10] sm:$0xff] 0.0
          %346 = vst [vmem:[#allocation2 + $0x18] sm:$0xff] 0.0
          %347 = vst [vmem:[#allocation2 + $0x20] sm:$0xff] 0.0
          %348 = vst [vmem:[#allocation2 + $0x28] sm:$0xff] 0.0
          %349 = vst [vmem:[#allocation2 + $0x30] sm:$0xff] 0.0
          %350 = vst [vmem:[#allocation2 + $0x38] sm:$0xff] 0.0
          %351 = vst [vmem:[#allocation2 + $0x40] sm:$0xff] 0.0
          %352 = vst [vmem:[#allocation2 + $0x48] sm:$0xff] 0.0
          %353 = vst [vmem:[#allocation2 + $0x50] sm:$0xff] 0.0
          %354 = vst [vmem:[#allocation2 + $0x58] sm:$0xff] 0.0
          %355 = vst [vmem:[#allocation2 + $0x60] sm:$0xff] 0.0
          %356 = vst [vmem:[#allocation2 + $0x68] sm:$0xff] 0.0
          %357 = vst [vmem:[#allocation2 + $0x70] sm:$0xff] 0.0
          %358 = vst [vmem:[#allocation2 + $0x78] sm:$0xff] 0.0
        $region52: #{tpu_custom_call.1} parent=35 // pred_fallthru
          _
        %v359 = vld [vmem:[#allocation2] sm:$0xff]
        %v360 = vld [vmem:[#allocation2 + $0x8] sm:$0xff]
        %v361 = vld [vmem:[#allocation2 + $0x10] sm:$0xff]
        %v362 = vld [vmem:[#allocation2 + $0x18] sm:$0xff]
        %v363 = vld [vmem:[#allocation2 + $0x20] sm:$0xff]
        %v364 = vld [vmem:[#allocation2 + $0x28] sm:$0xff]
        %v365 = vld [vmem:[#allocation2 + $0x30] sm:$0xff]
        %v366 = vld [vmem:[#allocation2 + $0x38] sm:$0xff]
        %v367 = vld [vmem:[#allocation2 + $0x40] sm:$0xff]
        %v368 = vld [vmem:[#allocation2 + $0x48] sm:$0xff]
        %v369 = vld [vmem:[#allocation2 + $0x50] sm:$0xff]
        %v370 = vld [vmem:[#allocation2 + $0x58] sm:$0xff]
        %v371 = vld [vmem:[#allocation2 + $0x60] sm:$0xff]
        %v372 = vld [vmem:[#allocation2 + $0x68] sm:$0xff]
        %v373 = vld [vmem:[#allocation2 + $0x70] sm:$0xff]
        %v374 = vld [vmem:[#allocation2 + $0x78] sm:$0xff]
        %v375 = vld [vmem:[%s281] sm:$0xf]
        %v376 = vld [vmem:[%s281 + $0x4] sm:$0xf]
        %v377 = vld [vmem:[%s281 + $0x8] sm:$0xf]
        %v378 = vld [vmem:[%s281 + $0xc] sm:$0xf]
        %v379 = vld [vmem:[%s281 + $0x10] sm:$0xf]
        %v380 = vld [vmem:[%s281 + $0x14] sm:$0xf]
        %v381 = vld [vmem:[%s281 + $0x18] sm:$0xf]
        %v382 = vld [vmem:[%s281 + $0x1c] sm:$0xf]
        %v383 = vld [vmem:[%s281 + $0x20] sm:$0xf]
        %v384 = vld [vmem:[%s281 + $0x24] sm:$0xf]
        %v385 = vld [vmem:[%s281 + $0x28] sm:$0xf]
        %v386 = vld [vmem:[%s281 + $0x2c] sm:$0xf]
        %v387 = vld [vmem:[%s281 + $0x30] sm:$0xf]
        %v388 = vld [vmem:[%s281 + $0x34] sm:$0xf]
        %v389 = vld [vmem:[%s281 + $0x38] sm:$0xf]
        %v390 = vld [vmem:[%s281 + $0x3c] sm:$0xf]
        %v391 = vld [vmem:[%s290] sm:$0xf]
        %v392 = vld [vmem:[%s290 + $0x4] sm:$0xf]
        %v393 = vld [vmem:[%s290 + $0x8] sm:$0xf]
        %v394 = vld [vmem:[%s290 + $0xc] sm:$0xf]
        %v395 = vld [vmem:[%s290 + $0x10] sm:$0xf]
        %v396 = vld [vmem:[%s290 + $0x14] sm:$0xf]
        %v397 = vld [vmem:[%s290 + $0x18] sm:$0xf]
        %v398 = vld [vmem:[%s290 + $0x1c] sm:$0xf]
        %v399 = vld [vmem:[%s290 + $0x20] sm:$0xf]
        %v400 = vld [vmem:[%s290 + $0x24] sm:$0xf]
        %v401 = vld [vmem:[%s290 + $0x28] sm:$0xf]
        %v402 = vld [vmem:[%s290 + $0x2c] sm:$0xf]
        %v403 = vld [vmem:[%s290 + $0x30] sm:$0xf]
        %v404 = vld [vmem:[%s290 + $0x34] sm:$0xf]
        %v405 = vld [vmem:[%s290 + $0x38] sm:$0xf]
        %v406 = vld [vmem:[%s290 + $0x3c] sm:$0xf]
        %s407 = scalar_lea.vmem %s281, 64 [#allocation3]
        %v408 = vld [vmem:[%s407] sm:$0xf]
        %v409 = vld [vmem:[%s407 + $0x4] sm:$0xf]
        %v410 = vld [vmem:[%s407 + $0x8] sm:$0xf]
        %v411 = vld [vmem:[%s407 + $0xc] sm:$0xf]
        %v412 = vld [vmem:[%s407 + $0x10] sm:$0xf]
        %v413 = vld [vmem:[%s407 + $0x14] sm:$0xf]
        %v414 = vld [vmem:[%s407 + $0x18] sm:$0xf]
        %v415 = vld [vmem:[%s407 + $0x1c] sm:$0xf]
        %v416 = vld [vmem:[%s407 + $0x20] sm:$0xf]
        %v417 = vld [vmem:[%s407 + $0x24] sm:$0xf]
        %v418 = vld [vmem:[%s407 + $0x28] sm:$0xf]
        %v419 = vld [vmem:[%s407 + $0x2c] sm:$0xf]
        %v420 = vld [vmem:[%s407 + $0x30] sm:$0xf]
        %v421 = vld [vmem:[%s407 + $0x34] sm:$0xf]
        %v422 = vld [vmem:[%s407 + $0x38] sm:$0xf]
        %v423 = vld [vmem:[%s407 + $0x3c] sm:$0xf]
        %v424 = vld [vmem:[%s299] sm:$0xf]
        %v425 = vld [vmem:[%s299 + $0x4] sm:$0xf]
        %v426 = vld [vmem:[%s299 + $0x8] sm:$0xf]
        %v427 = vld [vmem:[%s299 + $0xc] sm:$0xf]
        %v428 = vld [vmem:[%s299 + $0x10] sm:$0xf]
        %v429 = vld [vmem:[%s299 + $0x14] sm:$0xf]
        %v430 = vld [vmem:[%s299 + $0x18] sm:$0xf]
        %v431 = vld [vmem:[%s299 + $0x1c] sm:$0xf]
        %v432 = vld [vmem:[%s299 + $0x20] sm:$0xf]
        %v433 = vld [vmem:[%s299 + $0x24] sm:$0xf]
        %v434 = vld [vmem:[%s299 + $0x28] sm:$0xf]
        %v435 = vld [vmem:[%s299 + $0x2c] sm:$0xf]
        %v436 = vld [vmem:[%s299 + $0x30] sm:$0xf]
        %v437 = vld [vmem:[%s299 + $0x34] sm:$0xf]
        %v438 = vld [vmem:[%s299 + $0x38] sm:$0xf]
        %v439 = vld [vmem:[%s299 + $0x3c] sm:$0xf]
        %v456 = vunpack.c.l.b16 %v408
        %v457 = vunpack.c.l.b16 %v409
        %v458 = vunpack.c.l.b16 %v410
        %v459 = vunpack.c.l.b16 %v411
        %v460 = vunpack.c.l.b16 %v412
        %v461 = vunpack.c.l.b16 %v413
        %v462 = vunpack.c.l.b16 %v414
        %v463 = vunpack.c.l.b16 %v415
        %v464 = vunpack.c.l.b16 %v416
        %v465 = vunpack.c.l.b16 %v417
        %v466 = vunpack.c.l.b16 %v418
        %v467 = vunpack.c.l.b16 %v419
        %v468 = vunpack.c.l.b16 %v420
        %v469 = vunpack.c.l.b16 %v421
        %v470 = vunpack.c.l.b16 %v422
        %v471 = vunpack.c.l.b16 %v423
        %v472 = vpack.c.b16 %v457, %v456
        %v473 = vpack.c.b16 %v459, %v458
        %v474 = vpack.c.b16 %v461, %v460
        %v475 = vpack.c.b16 %v463, %v462
        %v476 = vpack.c.b16 %v465, %v464
        %v477 = vpack.c.b16 %v467, %v466
        %v478 = vpack.c.b16 %v469, %v468
        %v479 = vpack.c.b16 %v471, %v470
        %v504 = vunpack.c.l.b16 %v424
        %v505 = vunpack.c.l.b16 %v425
        %v506 = vunpack.c.l.b16 %v426
        %v507 = vunpack.c.l.b16 %v427
        %v508 = vunpack.c.l.b16 %v428
        %v509 = vunpack.c.l.b16 %v429
        %v510 = vunpack.c.l.b16 %v430
        %v511 = vunpack.c.l.b16 %v431
        %v512 = vunpack.c.l.b16 %v432
        %v513 = vunpack.c.l.b16 %v433
        %v514 = vunpack.c.l.b16 %v434
        %v515 = vunpack.c.l.b16 %v435
        %v516 = vunpack.c.l.b16 %v436
        %v517 = vunpack.c.l.b16 %v437
        %v518 = vunpack.c.l.b16 %v438
        %v519 = vunpack.c.l.b16 %v439
        %v520 = vpack.c.b16 %v505, %v504
        %v521 = vpack.c.b16 %v507, %v506
        %v522 = vpack.c.b16 %v509, %v508
        %v523 = vpack.c.b16 %v511, %v510
        %v524 = vpack.c.b16 %v513, %v512
        %v525 = vpack.c.b16 %v515, %v514
        %v526 = vpack.c.b16 %v517, %v516
        %v527 = vpack.c.b16 %v519, %v518
        %536 = vmatprep.subr.bf16.mxu0 0
        %537 = vmatpush1.bf16.msra.mxu0 %v520
        %538 = vmatprep.subr.bf16.mxu0 0
        %539 = vmatpush1.bf16.msra.mxu0 %v521
        %540 = vmatprep.subr.bf16.mxu0 0
        %541 = vmatpush1.bf16.msra.mxu0 %v522
        %542 = vmatprep.subr.bf16.mxu0 0
        %543 = vmatpush1.bf16.msra.mxu0 %v523
        %544 = vmatprep.subr.bf16.mxu0 0
        %545 = vmatpush1.bf16.msra.mxu0 %v524
        %546 = vmatprep.subr.bf16.mxu0 0
        %547 = vmatpush1.bf16.msra.mxu0 %v525
        %548 = vmatprep.subr.bf16.mxu0 0
        %549 = vmatpush1.bf16.msra.mxu0 %v526
        %550 = vmatprep.subr.bf16.mxu0 0
        %551 = vmatpush1.bf16.msra.mxu0 %v527
        %552 = vmatprep.subr.bf16.mxu0 0
        %553 = vmatpush1.bf16.msra.mxu0 0
        %554 = vmatprep.subr.bf16.mxu0 0
        %555 = vmatpush1.bf16.msra.mxu0 0
        %556 = vmatprep.subr.bf16.mxu0 0
        %557 = vmatpush1.bf16.msra.mxu0 0
        %558 = vmatprep.subr.bf16.mxu0 0
        %559 = vmatpush1.bf16.msra.mxu0 0
        %560 = vmatprep.subr.bf16.mxu0 0
        %561 = vmatpush1.bf16.msra.mxu0 0
        %562 = vmatprep.subr.bf16.mxu0 0
        %563 = vmatpush1.bf16.msra.mxu0 0
        %564 = vmatprep.subr.bf16.mxu0 0
        %565 = vmatpush1.bf16.msra.mxu0 0
        %566 = vmatprep.subr.bf16.mxu0 0
        %567 = vmatpush1.bf16.msra.mxu0 0
        %568 = vmatprep.mubr.bf16.mxu0 0
        %569 = vmatmul.mubr.bf16.gmra.mrb[0].mxu0 %v472
        %v570 = vpop.f32.mrb[0].mxu0
        %v571 = vadd.f32 0.0, %v570
        %v572 = vpop.f32.mrb[0].mxu0
        %v573 = vpop.f32.mrb[0].mxu0
        %v574 = vadd.f32 0.0, %v573
        %v575 = vpop.f32.mrb[0].mxu0
        %576 = vmatprep.mubr.bf16.mxu0 0
        %577 = vmatmul.mubr.bf16.gmra.mrb[0].mxu0 %v473
        %v578 = vpop.f32.mrb[0].mxu0
        %v579 = vadd.f32 0.0, %v578
        %v580 = vpop.f32.mrb[0].mxu0
        %v581 = vpop.f32.mrb[0].mxu0
        %v582 = vadd.f32 0.0, %v581
        %v583 = vpop.f32.mrb[0].mxu0
        %584 = vmatprep.mubr.bf16.mxu0 0
        %585 = vmatmul.mubr.bf16.gmra.mrb[0].mxu0 %v474
        %v586 = vpop.f32.mrb[0].mxu0
        %v587 = vadd.f32 0.0, %v586
        %v588 = vpop.f32.mrb[0].mxu0
        %v589 = vpop.f32.mrb[0].mxu0
        %v590 = vadd.f32 0.0, %v589
        %v591 = vpop.f32.mrb[0].mxu0
        %592 = vmatprep.mubr.bf16.mxu0 0
        %593 = vmatmul.mubr.bf16.gmra.mrb[0].mxu0 %v475
        %v594 = vpop.f32.mrb[0].mxu0
        %v595 = vadd.f32 0.0, %v594
        %v596 = vpop.f32.mrb[0].mxu0
        %v597 = vpop.f32.mrb[0].mxu0
        %v598 = vadd.f32 0.0, %v597
        %v599 = vpop.f32.mrb[0].mxu0
        %600 = vmatprep.mubr.bf16.mxu0 0
        %601 = vmatmul.mubr.bf16.gmra.mrb[0].mxu0 %v476
        %v602 = vpop.f32.mrb[0].mxu0
        %v603 = vadd.f32 0.0, %v602
        %v604 = vpop.f32.mrb[0].mxu0
        %v605 = vpop.f32.mrb[0].mxu0
        %v606 = vadd.f32 0.0, %v605
        %v607 = vpop.f32.mrb[0].mxu0
        %608 = vmatprep.mubr.bf16.mxu0 0
        %609 = vmatmul.mubr.bf16.gmra.mrb[0].mxu0 %v477
        %v610 = vpop.f32.mrb[0].mxu0
        %v611 = vadd.f32 0.0, %v610
        %v612 = vpop.f32.mrb[0].mxu0
        %v613 = vpop.f32.mrb[0].mxu0
        %v614 = vadd.f32 0.0, %v613
        %v615 = vpop.f32.mrb[0].mxu0
        %616 = vmatprep.mubr.bf16.mxu0 0
        %617 = vmatmul.mubr.bf16.gmra.mrb[0].mxu0 %v478
        %v618 = vpop.f32.mrb[0].mxu0
        %v619 = vadd.f32 0.0, %v618
        %v620 = vpop.f32.mrb[0].mxu0
        %v621 = vpop.f32.mrb[0].mxu0
        %v622 = vadd.f32 0.0, %v621
        %v623 = vpop.f32.mrb[0].mxu0
        %624 = vmatprep.mubr.bf16.mxu0 0
        %625 = vmatmul.mubr.bf16.gmra.mrb[0].mxu0 %v479
        %v626 = vpop.f32.mrb[0].mxu0
        %v627 = vadd.f32 0.0, %v626
        %v628 = vpop.f32.mrb[0].mxu0
        %v629 = vpop.f32.mrb[0].mxu0
        %v630 = vadd.f32 0.0, %v629
        %v631 = vpop.f32.mrb[0].mxu0
        %632 = vdwg.mxu0
        %v649 = vunpack.c.l.b16 %v375
        %v650 = vunpack.c.l.b16 %v376
        %v651 = vunpack.c.l.b16 %v377
        %v652 = vunpack.c.l.b16 %v378
        %v653 = vunpack.c.l.b16 %v379
        %v654 = vunpack.c.l.b16 %v380
        %v655 = vunpack.c.l.b16 %v381
        %v656 = vunpack.c.l.b16 %v382
        %v657 = vunpack.c.l.b16 %v383
        %v658 = vunpack.c.l.b16 %v384
        %v659 = vunpack.c.l.b16 %v385
        %v660 = vunpack.c.l.b16 %v386
        %v661 = vunpack.c.l.b16 %v387
        %v662 = vunpack.c.l.b16 %v388
        %v663 = vunpack.c.l.b16 %v389
        %v664 = vunpack.c.l.b16 %v390
        %v665 = vpack.c.b16 %v650, %v649
        %v666 = vpack.c.b16 %v652, %v651
        %v667 = vpack.c.b16 %v654, %v653
        %v668 = vpack.c.b16 %v656, %v655
        %v669 = vpack.c.b16 %v658, %v657
        %v670 = vpack.c.b16 %v660, %v659
        %v671 = vpack.c.b16 %v662, %v661
        %v672 = vpack.c.b16 %v664, %v663
        %v697 = vunpack.c.l.b16 %v391
        %v698 = vunpack.c.l.b16 %v392
        %v699 = vunpack.c.l.b16 %v393
        %v700 = vunpack.c.l.b16 %v394
        %v701 = vunpack.c.l.b16 %v395
        %v702 = vunpack.c.l.b16 %v396
        %v703 = vunpack.c.l.b16 %v397
        %v704 = vunpack.c.l.b16 %v398
        %v705 = vunpack.c.l.b16 %v399
        %v706 = vunpack.c.l.b16 %v400
        %v707 = vunpack.c.l.b16 %v401
        %v708 = vunpack.c.l.b16 %v402
        %v709 = vunpack.c.l.b16 %v403
        %v710 = vunpack.c.l.b16 %v404
        %v711 = vunpack.c.l.b16 %v405
        %v712 = vunpack.c.l.b16 %v406
        %v713 = vpack.c.b16 %v698, %v697
        %v714 = vpack.c.b16 %v700, %v699
        %v715 = vpack.c.b16 %v702, %v701
        %v716 = vpack.c.b16 %v704, %v703
        %v717 = vpack.c.b16 %v706, %v705
        %v718 = vpack.c.b16 %v708, %v707
        %v719 = vpack.c.b16 %v710, %v709
        %v720 = vpack.c.b16 %v712, %v711
        %729 = vmatprep.subr.bf16.mxu0 0
        %730 = vmatpush1.bf16.msra.mxu0 %v713
        %731 = vmatprep.subr.bf16.mxu0 0
        %732 = vmatpush1.bf16.msra.mxu0 %v714
        %733 = vmatprep.subr.bf16.mxu0 0
        %734 = vmatpush1.bf16.msra.mxu0 %v715
        %735 = vmatprep.subr.bf16.mxu0 0
        %736 = vmatpush1.bf16.msra.mxu0 %v716
        %737 = vmatprep.subr.bf16.mxu0 0
        %738 = vmatpush1.bf16.msra.mxu0 %v717
        %739 = vmatprep.subr.bf16.mxu0 0
        %740 = vmatpush1.bf16.msra.mxu0 %v718
        %741 = vmatprep.subr.bf16.mxu0 0
        %742 = vmatpush1.bf16.msra.mxu0 %v719
        %743 = vmatprep.subr.bf16.mxu0 0
        %744 = vmatpush1.bf16.msra.mxu0 %v720
        %745 = vmatprep.subr.bf16.mxu0 0
        %746 = vmatpush1.bf16.msra.mxu0 0
        %747 = vmatprep.subr.bf16.mxu0 0
        %748 = vmatpush1.bf16.msra.mxu0 0
        %749 = vmatprep.subr.bf16.mxu0 0
        %750 = vmatpush1.bf16.msra.mxu0 0
        %751 = vmatprep.subr.bf16.mxu0 0
        %752 = vmatpush1.bf16.msra.mxu0 0
        %753 = vmatprep.subr.bf16.mxu0 0
        %754 = vmatpush1.bf16.msra.mxu0 0
        %755 = vmatprep.subr.bf16.mxu0 0
        %756 = vmatpush1.bf16.msra.mxu0 0
        %757 = vmatprep.subr.bf16.mxu0 0
        %758 = vmatpush1.bf16.msra.mxu0 0
        %759 = vmatprep.subr.bf16.mxu0 0
        %760 = vmatpush1.bf16.msra.mxu0 0
        %761 = vmatprep.mubr.bf16.mxu0 0
        %762 = vmatmul.mubr.bf16.gmra.mrb[0].mxu0 %v665
        %v763 = vpop.f32.mrb[0].mxu0
        %v764 = vadd.f32 %v571, %v763
        %v765 = vpop.f32.mrb[0].mxu0
        %v766 = vpop.f32.mrb[0].mxu0
        %v767 = vadd.f32 %v574, %v766
        %v768 = vpop.f32.mrb[0].mxu0
        %769 = vmatprep.mubr.bf16.mxu0 0
        %770 = vmatmul.mubr.bf16.gmra.mrb[0].mxu0 %v666
        %v771 = vpop.f32.mrb[0].mxu0
        %v772 = vadd.f32 %v579, %v771
        %v773 = vpop.f32.mrb[0].mxu0
        %v774 = vpop.f32.mrb[0].mxu0
        %v775 = vadd.f32 %v582, %v774
        %v776 = vpop.f32.mrb[0].mxu0
        %777 = vmatprep.mubr.bf16.mxu0 0
        %778 = vmatmul.mubr.bf16.gmra.mrb[0].mxu0 %v667
        %v779 = vpop.f32.mrb[0].mxu0
        %v780 = vadd.f32 %v587, %v779
        %v781 = vpop.f32.mrb[0].mxu0
        %v782 = vpop.f32.mrb[0].mxu0
        %v783 = vadd.f32 %v590, %v782
        %v784 = vpop.f32.mrb[0].mxu0
        %785 = vmatprep.mubr.bf16.mxu0 0
        %786 = vmatmul.mubr.bf16.gmra.mrb[0].mxu0 %v668
        %v787 = vpop.f32.mrb[0].mxu0
        %v788 = vadd.f32 %v595, %v787
        %v789 = vpop.f32.mrb[0].mxu0
        %v790 = vpop.f32.mrb[0].mxu0
        %v791 = vadd.f32 %v598, %v790
        %v792 = vpop.f32.mrb[0].mxu0
        %793 = vmatprep.mubr.bf16.mxu0 0
        %794 = vmatmul.mubr.bf16.gmra.mrb[0].mxu0 %v669
        %v795 = vpop.f32.mrb[0].mxu0
        %v796 = vadd.f32 %v603, %v795
        %v797 = vpop.f32.mrb[0].mxu0
        %v798 = vpop.f32.mrb[0].mxu0
        %v799 = vadd.f32 %v606, %v798
        %v800 = vpop.f32.mrb[0].mxu0
        %801 = vmatprep.mubr.bf16.mxu0 0
        %802 = vmatmul.mubr.bf16.gmra.mrb[0].mxu0 %v670
        %v803 = vpop.f32.mrb[0].mxu0
        %v804 = vadd.f32 %v611, %v803
        %v805 = vpop.f32.mrb[0].mxu0
        %v806 = vpop.f32.mrb[0].mxu0
        %v807 = vadd.f32 %v614, %v806
        %v808 = vpop.f32.mrb[0].mxu0
        %809 = vmatprep.mubr.bf16.mxu0 0
        %810 = vmatmul.mubr.bf16.gmra.mrb[0].mxu0 %v671
        %v811 = vpop.f32.mrb[0].mxu0
        %v812 = vadd.f32 %v619, %v811
        %v813 = vpop.f32.mrb[0].mxu0
        %v814 = vpop.f32.mrb[0].mxu0
        %v815 = vadd.f32 %v622, %v814
        %v816 = vpop.f32.mrb[0].mxu0
        %817 = vmatprep.mubr.bf16.mxu0 0
        %818 = vmatmul.mubr.bf16.gmra.mrb[0].mxu0 %v672
        %v819 = vpop.f32.mrb[0].mxu0
        %v820 = vadd.f32 %v627, %v819
        %v821 = vpop.f32.mrb[0].mxu0
        %v822 = vpop.f32.mrb[0].mxu0
        %v823 = vadd.f32 %v630, %v822
        %v824 = vpop.f32.mrb[0].mxu0
        %825 = vdwg.mxu0
        %v826 = vadd.f32 %v359, %v764
        %v827 = vadd.f32 %v360, %v767
        %v828 = vadd.f32 %v361, %v772
        %v829 = vadd.f32 %v362, %v775
        %v830 = vadd.f32 %v363, %v780
        %v831 = vadd.f32 %v364, %v783
        %v832 = vadd.f32 %v365, %v788
        %v833 = vadd.f32 %v366, %v791
        %v834 = vadd.f32 %v367, %v796
        %v835 = vadd.f32 %v368, %v799
        %v836 = vadd.f32 %v369, %v804
        %v837 = vadd.f32 %v370, %v807
        %v838 = vadd.f32 %v371, %v812
        %v839 = vadd.f32 %v372, %v815
        %v840 = vadd.f32 %v373, %v820
        %v841 = vadd.f32 %v374, %v823
        %842 = vst [vmem:[#allocation2] sm:$0xff] %v826
        %843 = vst [vmem:[#allocation2 + $0x8] sm:$0xff] %v827
        %844 = vst [vmem:[#allocation2 + $0x10] sm:$0xff] %v828
        %845 = vst [vmem:[#allocation2 + $0x18] sm:$0xff] %v829
        %846 = vst [vmem:[#allocation2 + $0x20] sm:$0xff] %v830
        %847 = vst [vmem:[#allocation2 + $0x28] sm:$0xff] %v831
        %848 = vst [vmem:[#allocation2 + $0x30] sm:$0xff] %v832
        %849 = vst [vmem:[#allocation2 + $0x38] sm:$0xff] %v833
        %850 = vst [vmem:[#allocation2 + $0x40] sm:$0xff] %v834
        %851 = vst [vmem:[#allocation2 + $0x48] sm:$0xff] %v835
        %852 = vst [vmem:[#allocation2 + $0x50] sm:$0xff] %v836
        %853 = vst [vmem:[#allocation2 + $0x58] sm:$0xff] %v837
        %854 = vst [vmem:[#allocation2 + $0x60] sm:$0xff] %v838
        %855 = vst [vmem:[#allocation2 + $0x68] sm:$0xff] %v839
        %856 = vst [vmem:[#allocation2 + $0x70] sm:$0xff] %v840
        %857 = vst [vmem:[#allocation2 + $0x78] sm:$0xff] %v841
        %p858 = scmp.eq.s32.totalorder %s29, 1
        // Predicated region
        $region53: #{tpu_custom_call.1} parent=35 // pred_check
          %p859 = pneg %p858
        $region54: #{tpu_custom_call.1} parent=35 // pred_check_branch
          %861 = sbr.rel (%p859) target = $region56
        $region55: #{tpu_custom_call.1} parent=35 // pred_region
          %v862 = vld [vmem:[#allocation2] sm:$0xff]
          %v863 = vld [vmem:[#allocation2 + $0x8] sm:$0xff]
          %v864 = vld [vmem:[#allocation2 + $0x10] sm:$0xff]
          %v865 = vld [vmem:[#allocation2 + $0x18] sm:$0xff]
          %v866 = vld [vmem:[#allocation2 + $0x20] sm:$0xff]
          %v867 = vld [vmem:[#allocation2 + $0x28] sm:$0xff]
          %v868 = vld [vmem:[#allocation2 + $0x30] sm:$0xff]
          %v869 = vld [vmem:[#allocation2 + $0x38] sm:$0xff]
          %v870 = vld [vmem:[#allocation2 + $0x40] sm:$0xff]
          %v871 = vld [vmem:[#allocation2 + $0x48] sm:$0xff]
          %v872 = vld [vmem:[#allocation2 + $0x50] sm:$0xff]
          %v873 = vld [vmem:[#allocation2 + $0x58] sm:$0xff]
          %v874 = vld [vmem:[#allocation2 + $0x60] sm:$0xff]
          %v875 = vld [vmem:[#allocation2 + $0x68] sm:$0xff]
          %v876 = vld [vmem:[#allocation2 + $0x70] sm:$0xff]
          %v877 = vld [vmem:[#allocation2 + $0x78] sm:$0xff]
          %v878 = vld [vmem:[%s3] sm:$0x1]
          %v880 = vlaneseq
          %v881 = vshrl.u32 %v880, 7
          %v882 = vsub.s32 0, %v881
          %v883 = vrot.slane %v878, %v882
          %v885 = vadd.f32 %v862, %v883
          %v886 = vadd.f32 %v863, %v883
          %v887 = vadd.f32 %v864, %v883
          %v888 = vadd.f32 %v865, %v883
          %v889 = vadd.f32 %v866, %v883
          %v890 = vadd.f32 %v867, %v883
          %v891 = vadd.f32 %v868, %v883
          %v892 = vadd.f32 %v869, %v883
          %v893 = vadd.f32 %v870, %v883
          %v894 = vadd.f32 %v871, %v883
          %v895 = vadd.f32 %v872, %v883
          %v896 = vadd.f32 %v873, %v883
          %v897 = vadd.f32 %v874, %v883
          %v898 = vadd.f32 %v875, %v883
          %v899 = vadd.f32 %v876, %v883
          %v900 = vadd.f32 %v877, %v883
          %v901 = vmax.f32 %v885, 0.0
          %v902 = vmax.f32 %v886, 0.0
          %v903 = vmax.f32 %v887, 0.0
          %v904 = vmax.f32 %v888, 0.0
          %v905 = vmax.f32 %v889, 0.0
          %v906 = vmax.f32 %v890, 0.0
          %v907 = vmax.f32 %v891, 0.0
          %v908 = vmax.f32 %v892, 0.0
          %v909 = vmax.f32 %v893, 0.0
          %v910 = vmax.f32 %v894, 0.0
          %v911 = vmax.f32 %v895, 0.0
          %v912 = vmax.f32 %v896, 0.0
          %v913 = vmax.f32 %v897, 0.0
          %v914 = vmax.f32 %v898, 0.0
          %v915 = vmax.f32 %v899, 0.0
          %v916 = vmax.f32 %v900, 0.0
          %917 = vst [vmem:[%s333] sm:$0xff] %v901
          %918 = vst [vmem:[%s333 + $0x8] sm:$0xff] %v902
          %919 = vst [vmem:[%s333 + $0x10] sm:$0xff] %v903
          %920 = vst [vmem:[%s333 + $0x18] sm:$0xff] %v904
          %921 = vst [vmem:[%s333 + $0x20] sm:$0xff] %v905
          %922 = vst [vmem:[%s333 + $0x28] sm:$0xff] %v906
          %923 = vst [vmem:[%s333 + $0x30] sm:$0xff] %v907
          %924 = vst [vmem:[%s333 + $0x38] sm:$0xff] %v908
          %925 = vst [vmem:[%s333 + $0x40] sm:$0xff] %v909
          %926 = vst [vmem:[%s333 + $0x48] sm:$0xff] %v910
          %927 = vst [vmem:[%s333 + $0x50] sm:$0xff] %v911
          %928 = vst [vmem:[%s333 + $0x58] sm:$0xff] %v912
          %929 = vst [vmem:[%s333 + $0x60] sm:$0xff] %v913
          %930 = vst [vmem:[%s333 + $0x68] sm:$0xff] %v914
          %931 = vst [vmem:[%s333 + $0x70] sm:$0xff] %v915
          %932 = vst [vmem:[%s333 + $0x78] sm:$0xff] %v916
        $region56: #{tpu_custom_call.1} parent=35 // pred_fallthru
          _
        %s933 = sand.u32 %s145, 1
        %s934 = scalar_lea.sflag [#allocation5], %s933
        %s935 = sand.u32 %s145, 1
        %s936 = smul.addr %s935, 128
        %s937 = scalar_lea.vmem [#allocation9], %s936
        // Predicated region
        $region57: #{tpu_custom_call.1} parent=35 // pred_check
          %p938 = pneg %p155
        $region58: #{tpu_custom_call.1} parent=35 // pred_check_branch
          %940 = sbr.rel (%p938) target = $region60
        $region59: #{tpu_custom_call.1} parent=35 // pred_region
          %s941 = smul.u32 16, %s28
          %s943 = ssub.s32 2048, 2048
          %944 = vsyncadd %s934, %s943
          %s945 = smul.addr %s941, 128
          %s946 = scalar_lea.hbm %s4, %s945
          %s947 = sshll.u32 %s937, 4
          %s948 = int_to_ptr.vmem [resolvable:$true] %s947
          %953 = dma.vmem_to_hbm [thread:$0]  %s948, 2048, %s946, %s934, 128, 128, 8
        $region60: #{tpu_custom_call.1} parent=35 // pred_fallthru
          _
      $region36: #{tpu_custom_call.1} parent=5 // pred_fallthru
        _
      %p954 = scmp.le.s32.totalorder 2, %s19
      // Predicated region
      $region61: #{tpu_custom_call.1} parent=5 // pred_check
        %p955 = pneg %p954
      $region62: #{tpu_custom_call.1} parent=5 // pred_check_branch
        %957 = sbr.rel (%p955) target = $region64
      $region63: #{tpu_custom_call.1} parent=5 // pred_region
        %s958 = ssub.s32 %s19, 2
        // Predicated region
        $region65: #{tpu_custom_call.1} parent=63 // pred_check
          %p959 = pneg %p161
        $region66: #{tpu_custom_call.1} parent=63 // pred_check_branch
          %961 = sbr.rel (%p959) target = $region68
        $region67: #{tpu_custom_call.1} parent=63 // pred_region
          %s962 = sand.u32 %s146, 1
          %s963 = scalar_lea.sflag [#allocation5], %s962
          %s964 = sand.u32 %s146, 1
          %s965 = smul.addr %s964, 128
          %s966 = scalar_lea.vmem [#allocation9], %s965
          %967 = dma.done %s963, 2048
        $region68: #{tpu_custom_call.1} parent=63 // pred_fallthru
          _
      $region64: #{tpu_custom_call.1} parent=5 // pred_fallthru
        _
    $region6: #{tpu_custom_call.1} parent=1 // loop_footer
      %s23 = sadd.s32 1, %s19
    $region7: #{tpu_custom_call.1} parent=1 // loop_footer_branch
      %18 = sbr.rel target = $region3
    $region8: #{tpu_custom_call.1} parent=1 // loop_exit
      _
    %968 = vsyncpa [#allocation4], 1
    %s969 = scalar_lea.sflag [#allocation4], 1
    %970 = vsyncpa %s969, 1
    %971 = vsyncpa [#allocation7], 1
    %s972 = scalar_lea.sflag [#allocation7], 1
    %973 = vsyncpa %s972, 1
    %974 = vsyncpa [#allocation5], 1
    %s975 = scalar_lea.sflag [#allocation5], 1
    %976 = vsyncpa %s975, 1

</llo_original>
